<compile_context>
chip_gen: v6e
topology: v6e:2x2x1
jax: 0.10.0
libtpu: 0.0.40
codegen_flags: <defaults>
</compile_context>

<pallas_src>
import functools
from typing import NamedTuple

import jax
import jax.numpy as jnp
from jax.experimental import pallas as pl
from jax.experimental.pallas import tpu as pltpu


def _round_up(x, m):
    return ((x + m - 1) // m) * m


def _cdiv(a, b):
    return (a + b - 1) // b


# ---------------------------------------------------------------------------
# Pallas kernel: full MLP forward for one batch tile.
#   x_ref     : (TB, in_pad)                       bf16, zero-padded input
#   p_ref     : (in_pad + (L-1)*P + bias_rows, P)  bf16, packed params
#   means_ref : (TB, P)                            bf16, sigmoid(logits)
# Offsets are static Python ints baked in via functools.partial, so every slice
# is an aligned static view.
# ---------------------------------------------------------------------------
def _actor_mlp_kernel(n_linear, in_pad, P, bias_rows, x_ref, p_ref, means_ref):
    bias_off = in_pad + (n_linear - 1) * P            # static, multiple of 16
    b_all = p_ref[pl.ds(bias_off, bias_rows), :].astype(jnp.float32)

    h = x_ref[...]                                    # (TB, in_pad) bf16
    w_off, k = 0, in_pad
    for li in range(n_linear):
        w = p_ref[pl.ds(w_off, k), :]                 # (k, P) bf16, static slice
        z = jnp.dot(h, w, preferred_element_type=jnp.float32)   # f32 accumulate
        z = z + b_all[li:li + 1, :]                   # (TB, P) f32
        if li < n_linear - 1:
            # ReLU on the f32 accumulator, back to bf16 for the next MXU pass.
            h = jnp.maximum(z, 0.0).astype(jnp.bfloat16)
        else:
            # output_function = Sigmoid (EUP exp path); lane-dense full-width store.
            means_ref[...] = jax.nn.sigmoid(z).astype(means_ref.dtype)
        w_off += k
        k = P


# ---------------------------------------------------------------------------
# One-time parameter packing (hoisted out of the per-call hot path).
# ---------------------------------------------------------------------------
class PackedActorParams(NamedTuple):
    slab: jax.Array          # (in_pad + (L-1)*P + bias_rows, P) bf16
    n_linear: int
    in_dim: int
    in_pad: int
    width: int               # P = common padded lane width of activations
    bias_rows: int
    actions_nb: int


def pack_actor_params(weights, biases):
    """Pack all layer weights + biases into one lane-dense bf16 slab.

    Call ONCE at init.  Weights are traced args, so XLA cannot constant-fold
    this; doing it per forward call would add 2*L pad kernels + an HBM
    write/read of the concat on every step of an RL loop.
    """
    n_linear = len(weights)
    in_dim = weights[0].shape[0]
    actions_nb = weights[-1].shape[1]
    in_pad = _round_up(in_dim, 16)                              # bf16 sublane granule
    P = _round_up(max(w.shape[1] for w in weights), 128)        # common lane width
    bias_rows = _round_up(n_linear, 16)

    chunks = []
    # Layer 0 keeps only the (16-rounded) real input rows -> small K first dot.
    w0 = jnp.zeros((in_pad, P), jnp.float32).at[
        : weights[0].shape[0], : weights[0].shape[1]].set(weights[0].astype(jnp.float32))
    chunks.append(w0)
    for w in weights[1:]:
        wp = jnp.zeros((P, P), jnp.float32).at[
            : w.shape[0], : w.shape[1]].set(w.astype(jnp.float32))
        chunks.append(wp)
    # Shared bias block: one row per layer (zero columns beyond real out dims).
    bp = jnp.zeros((bias_rows, P), jnp.float32)
    for li, b in enumerate(biases):
        bp = bp.at[li, : b.shape[-1]].set(b.reshape(-1).astype(jnp.float32))
    chunks.append(bp)

    slab = jnp.concatenate(chunks, axis=0).astype(jnp.bfloat16)
    return PackedActorParams(slab, n_linear, in_dim, in_pad, P, bias_rows, actions_nb)


# ---------------------------------------------------------------------------
# Batch tile: big tiles amortize the ~0.35us/grid-step overhead (mem-bound
# tiling hits ~85% of HBM roofline at 512-1024 rows); keep >=2 grid steps when
# B >= 1024 so v7x's two TensorCores both get work.  Sweep 512/1024/2048.
# ---------------------------------------------------------------------------
def _default_batch_tile(B):
    b16 = _round_up(B, 16)
    tile = min(1024, b16)
    if B >= 1024 and _cdiv(b16, tile) < 2:
        tile = _round_up(_cdiv(b16, 2), 16)
    return tile


# ---------------------------------------------------------------------------
# Forward wrapper.
# ---------------------------------------------------------------------------
def actor_continuous_forward(x, params: PackedActorParams, log_stds, *, batch_tile=None):
    """x: (B, input_size); params: PackedActorParams; log_stds: (1, actions_nb).
    Returns (means, stds), each (B, actions_nb) float32."""
    B, in_dim = x.shape
    assert in_dim == params.in_dim
    L, in_pad, P = params.n_linear, params.in_pad, params.width

    if batch_tile is None:
        batch_tile = _default_batch_tile(B)
    B_pad = _round_up(B, batch_tile)

    # Input kept at its real (16-rounded) lane width: no 128-lane HBM pad pass.
    x_bf = x.astype(jnp.bfloat16)
    if B_pad != B or in_pad != in_dim:
        x_bf = jnp.pad(x_bf, ((0, B_pad - B), (0, in_pad - in_dim)))

    kernel = functools.partial(_actor_mlp_kernel, L, in_pad, P, params.bias_rows)

    grid = (B_pad // batch_tile,)
    x_spec = pl.BlockSpec((batch_tile, in_pad), lambda i: (i, 0))
    out_spec = pl.BlockSpec((batch_tile, P), lambda i: (i, 0))
    out_shape = jax.ShapeDtypeStruct((B_pad, P), jnp.bfloat16)
    cparams = pltpu.CompilerParams(
        dimension_semantics=("parallel",))            # v7x: split batch over 2 TCs

    def run(single_buffer_slab):
        if single_buffer_slab:
            # Constant block index -> double-buffering the slab only wastes VMEM.
            p_spec = pl.BlockSpec(params.slab.shape, lambda i: (0, 0),
                                  pipeline_mode=pl.Buffered(1))
        else:
            p_spec = pl.BlockSpec(params.slab.shape, lambda i: (0, 0))
        return pl.pallas_call(
            kernel,
            out_shape=out_shape,
            grid=grid,
            in_specs=[x_spec, p_spec],
            out_specs=out_spec,
            compiler_params=cparams,
        )(x_bf, params.slab)

    try:
        means_pad = run(True)
    except Exception:
        # Fallback for jax versions without BlockSpec(pipeline_mode=...).
        means_pad = run(False)

    means = means_pad[:B, : params.actions_nb].astype(jnp.float32)
    # stds has no dependence on x / the matmul chain -> cheap fused XLA op.
    stds = jnp.broadcast_to(jnp.exp(log_stds.astype(jnp.float32)), means.shape)
    return means, stds


# ---------------------------------------------------------------------------
# Deterministic parameter construction (mirrors FCNet.__init__ shapes).
# ---------------------------------------------------------------------------
def make_params(key, input_size, hidden_size, hidden_layers_nb, actions_nb):
    dims = [input_size] + [hidden_size] * (hidden_layers_nb + 1) + [actions_nb]
    weights, biases = [], []
    for i in range(len(dims) - 1):
        key, wk, bk = jax.random.split(key, 3)
        bound = 1.0 / jnp.sqrt(dims[i])
        w = jax.random.uniform(wk, (dims[i], dims[i + 1]), jnp.float32,
                               minval=-bound, maxval=bound)
        b = jax.random.uniform(bk, (1, dims[i + 1]), jnp.float32,
                               minval=-bound, maxval=bound)
        weights.append(w)
        biases.append(b)
    log_stds = jnp.zeros((1, actions_nb), jnp.float32)   # nn.Parameter(zeros)
    return weights, biases, log_stds


# Pure-JAX f32 reference for correctness checking.
def reference_forward(x, weights, biases, log_stds):
    h = x
    for w, b in zip(weights[:-1], biases[:-1]):
        h = jnp.maximum(h @ w + b, 0.0)
    means = jax.nn.sigmoid(h @ weights[-1] + biases[-1])
    stds = jnp.broadcast_to(jnp.exp(log_stds), means.shape)
    return means, stds


if __name__ == "__main__":
    # Small config consistent with the module:
    #   input_size=16, hidden_layers_nb=2, hidden_size=32, actions_nb=4
    batch, input_size, hidden_size, hidden_layers_nb, actions_nb = 2, 16, 32, 2, 4

    key = jax.random.PRNGKey(0)
    key, xk = jax.random.split(key)
    x = jax.random.normal(xk, (batch, input_size), jnp.float32)

    weights, biases, log_stds = make_params(
        key, input_size, hidden_size, hidden_layers_nb, actions_nb)

    packed = pack_actor_params(weights, biases)   # once, outside the hot loop

    means, stds = actor_continuous_forward(x, packed, log_stds)
    jax.block_until_ready((means, stds))

    ref_means, ref_stds = reference_forward(x, weights, biases, log_stds)
    assert means.shape == (batch, actions_nb) and stds.shape == (batch, actions_nb)
    # bf16 storage of x / params / means -> loosened tolerance vs. the f32 reference.
    assert jnp.allclose(means, ref_means, atol=2e-2, rtol=2e-2)
    assert jnp.allclose(stds, ref_stds, atol=1e-6, rtol=1e-6)

    print("KERNEL_OK")
</pallas_src>

<mosaic_0001>
module attributes {stable_mosaic.version = 11 : i64} {
  func.func @_actor_mlp_kernel(%arg0: i32, %arg1: memref<16x16xbf16, #tpu.memory_space<vmem>>, %arg2: memref<416x128xbf16, #tpu.memory_space<vmem>>, %arg3: memref<16x128xbf16, #tpu.memory_space<vmem>>) attributes {dimension_semantics = [#tpu.dimension_semantics<parallel>], iteration_bounds = array<i64: 1>, scalar_prefetch = 0 : i64, scratch_operands = 0 : i64, tpu.core_type = #tpu.core_type<tc>, window_params = [{transform_indices = @transform_0, window_bounds = array<i64: 16, 16>}, {pipeline_mode = #tpu.pipeline_mode<synchronous>, transform_indices = @transform_1, window_bounds = array<i64: 416, 128>}, {transform_indices = @transform_2, window_bounds = array<i64: 16, 128>}]} {
    %c400 = arith.constant 400 : index
    %c0 = arith.constant 0 : index
    %0 = vector.load %arg2[%c400, %c0] : memref<416x128xbf16, #tpu.memory_space<vmem>>, vector<16x128xbf16>
    %1 = arith.extf %0 : vector<16x128xbf16> to vector<16x128xf32>
    %c0_0 = arith.constant 0 : index
    %c0_1 = arith.constant 0 : index
    %2 = vector.load %arg1[%c0_0, %c0_1] : memref<16x16xbf16, #tpu.memory_space<vmem>>, vector<16x16xbf16>
    %c0_2 = arith.constant 0 : index
    %c0_3 = arith.constant 0 : index
    %3 = vector.load %arg2[%c0_2, %c0_3] : memref<416x128xbf16, #tpu.memory_space<vmem>>, vector<16x128xbf16>
    %cst = arith.constant dense<0.000000e+00> : vector<16x128xf32>
    %4 = tpu.matmul %2, %3, %cst {dimension_numbers = #tpu.dot_dimension_numbers<[1], [0], [0], [1], [0, 0, 1, 1], [], []>} : vector<16x16xbf16>, vector<16x128xbf16>, vector<16x128xf32> -> vector<16x128xf32>
    %5 = vector.extract_strided_slice %1 {offsets = [0, 0], sizes = [1, 128], strides = [1, 1]} : vector<16x128xf32> to vector<1x128xf32>
    %6 = vector.broadcast %5 : vector<1x128xf32> to vector<16x128xf32>
    %7 = arith.addf %4, %6 : vector<16x128xf32>
    %cst_4 = arith.constant 0.000000e+00 : f32
    %8 = vector.broadcast %cst_4 : f32 to vector<16x128xf32>
    %9 = arith.maximumf %7, %8 : vector<16x128xf32>
    %10 = arith.truncf %9 : vector<16x128xf32> to vector<16x128xbf16>
    %c16 = arith.constant 16 : index
    %c0_5 = arith.constant 0 : index
    %11 = vector.load %arg2[%c16, %c0_5] : memref<416x128xbf16, #tpu.memory_space<vmem>>, vector<128x128xbf16>
    %cst_6 = arith.constant dense<0.000000e+00> : vector<16x128xf32>
    %12 = tpu.matmul %10, %11, %cst_6 {dimension_numbers = #tpu.dot_dimension_numbers<[1], [0], [0], [1], [0, 0, 1, 1], [], []>} : vector<16x128xbf16>, vector<128x128xbf16>, vector<16x128xf32> -> vector<16x128xf32>
    %13 = vector.extract_strided_slice %1 {offsets = [1, 0], sizes = [1, 128], strides = [1, 1]} : vector<16x128xf32> to vector<1x128xf32>
    %14 = vector.broadcast %13 : vector<1x128xf32> to vector<16x128xf32>
    %15 = arith.addf %12, %14 : vector<16x128xf32>
    %cst_7 = arith.constant 0.000000e+00 : f32
    %16 = vector.broadcast %cst_7 : f32 to vector<16x128xf32>
    %17 = arith.maximumf %15, %16 : vector<16x128xf32>
    %18 = arith.truncf %17 : vector<16x128xf32> to vector<16x128xbf16>
    %c144 = arith.constant 144 : index
    %c0_8 = arith.constant 0 : index
    %19 = vector.load %arg2[%c144, %c0_8] : memref<416x128xbf16, #tpu.memory_space<vmem>>, vector<128x128xbf16>
    %cst_9 = arith.constant dense<0.000000e+00> : vector<16x128xf32>
    %20 = tpu.matmul %18, %19, %cst_9 {dimension_numbers = #tpu.dot_dimension_numbers<[1], [0], [0], [1], [0, 0, 1, 1], [], []>} : vector<16x128xbf16>, vector<128x128xbf16>, vector<16x128xf32> -> vector<16x128xf32>
    %21 = vector.extract_strided_slice %1 {offsets = [2, 0], sizes = [1, 128], strides = [1, 1]} : vector<16x128xf32> to vector<1x128xf32>
    %22 = vector.broadcast %21 : vector<1x128xf32> to vector<16x128xf32>
    %23 = arith.addf %20, %22 : vector<16x128xf32>
    %cst_10 = arith.constant 0.000000e+00 : f32
    %24 = vector.broadcast %cst_10 : f32 to vector<16x128xf32>
    %25 = arith.maximumf %23, %24 : vector<16x128xf32>
    %26 = arith.truncf %25 : vector<16x128xf32> to vector<16x128xbf16>
    %c272 = arith.constant 272 : index
    %c0_11 = arith.constant 0 : index
    %27 = vector.load %arg2[%c272, %c0_11] : memref<416x128xbf16, #tpu.memory_space<vmem>>, vector<128x128xbf16>
    %cst_12 = arith.constant dense<0.000000e+00> : vector<16x128xf32>
    %28 = tpu.matmul %26, %27, %cst_12 {dimension_numbers = #tpu.dot_dimension_numbers<[1], [0], [0], [1], [0, 0, 1, 1], [], []>} : vector<16x128xbf16>, vector<128x128xbf16>, vector<16x128xf32> -> vector<16x128xf32>
    %29 = vector.extract_strided_slice %1 {offsets = [3, 0], sizes = [1, 128], strides = [1, 1]} : vector<16x128xf32> to vector<1x128xf32>
    %30 = vector.broadcast %29 : vector<1x128xf32> to vector<16x128xf32>
    %31 = arith.addf %28, %30 : vector<16x128xf32>
    %32 = arith.negf %31 : vector<16x128xf32>
    %33 = math.exp %32 : vector<16x128xf32>
    %cst_13 = arith.constant 1.000000e+00 : f32
    %34 = vector.broadcast %cst_13 : f32 to vector<16x128xf32>
    %35 = arith.addf %34, %33 : vector<16x128xf32>
    %36 = arith.divf %34, %35 : vector<16x128xf32>
    %37 = arith.truncf %36 : vector<16x128xf32> to vector<16x128xbf16>
    %c0_14 = arith.constant 0 : index
    %c0_15 = arith.constant 0 : index
    %38 = vector.load %arg3[%c0_14, %c0_15] : memref<16x128xbf16, #tpu.memory_space<vmem>>, vector<16x128xbf16>
    tpu.vector_store %arg3[%c0_14, %c0_15], %37 {strides = array<i32>} : memref<16x128xbf16, #tpu.memory_space<vmem>>, vector<16x128xbf16>,
    return
  }
  func.func @transform_0(%arg0: i32) -> (i32, i32) {
    %c0_i32 = arith.constant 0 : i32
    %c0_i32_0 = arith.constant 0 : i32
    return %arg0, %c0_i32 : i32, i32
  }
  func.func @transform_1(%arg0: i32) -> (i32, i32) {
    %c0_i32 = arith.constant 0 : i32
    %c0_i32_0 = arith.constant 0 : i32
    %c0_i32_1 = arith.constant 0 : i32
    return %c0_i32, %c0_i32_0 : i32, i32
  }
  func.func @transform_2(%arg0: i32) -> (i32, i32) {
    %c0_i32 = arith.constant 0 : i32
    %c0_i32_0 = arith.constant 0 : i32
    return %arg0, %c0_i32 : i32, i32
  }
}

module attributes {stable_mosaic.version = 11 : i64} {
  func.func @_actor_mlp_kernel(%arg0: i32, %arg1: memref<16x16xbf16, #tpu.memory_space<vmem>>, %arg2: memref<416x128xbf16, #tpu.memory_space<vmem>>, %arg3: memref<16x128xbf16, #tpu.memory_space<vmem>>) attributes {dimension_semantics = [#tpu.dimension_semantics<parallel>], iteration_bounds = array<i64: 1>, scalar_prefetch = 0 : i64, scratch_operands = 0 : i64, tpu.core_type = #tpu.core_type<tc>, window_params = [{transform_indices = @transform_0, window_bounds = array<i64: 16, 16>}, {pipeline_mode = #tpu.pipeline_mode<synchronous>, transform_indices = @transform_1, window_bounds = array<i64: 416, 128>}, {transform_indices = @transform_2, window_bounds = array<i64: 16, 128>}]} {
    %c400 = arith.constant 400 : index
    %c0 = arith.constant 0 : index
    %0 = vector.load %arg2[%c400, %c0] : memref<416x128xbf16, #tpu.memory_space<vmem>>, vector<16x128xbf16>
    %1 = arith.extf %0 : vector<16x128xbf16> to vector<16x128xf32>
    %c0_0 = arith.constant 0 : index
    %c0_1 = arith.constant 0 : index
    %2 = vector.load %arg1[%c0_0, %c0_1] : memref<16x16xbf16, #tpu.memory_space<vmem>>, vector<16x16xbf16>
    %c0_2 = arith.constant 0 : index
    %c0_3 = arith.constant 0 : index
    %3 = vector.load %arg2[%c0_2, %c0_3] : memref<416x128xbf16, #tpu.memory_space<vmem>>, vector<16x128xbf16>
    %cst = arith.constant dense<0.000000e+00> : vector<16x128xf32>
    %4 = tpu.matmul %2, %3, %cst {dimension_numbers = #tpu.dot_dimension_numbers<[1], [0], [0], [1], [0, 0, 1, 1], [], []>} : vector<16x16xbf16>, vector<16x128xbf16>, vector<16x128xf32> -> vector<16x128xf32>
    %5 = vector.extract_strided_slice %1 {offsets = [0, 0], sizes = [1, 128], strides = [1, 1]} : vector<16x128xf32> to vector<1x128xf32>
    %6 = vector.broadcast %5 : vector<1x128xf32> to vector<16x128xf32>
    %7 = arith.addf %4, %6 : vector<16x128xf32>
    %cst_4 = arith.constant 0.000000e+00 : f32
    %8 = vector.broadcast %cst_4 : f32 to vector<16x128xf32>
    %9 = arith.maximumf %7, %8 : vector<16x128xf32>
    %10 = arith.truncf %9 : vector<16x128xf32> to vector<16x128xbf16>
    %c16 = arith.constant 16 : index
    %c0_5 = arith.constant 0 : index
    %11 = vector.load %arg2[%c16, %c0_5] : memref<416x128xbf16, #tpu.memory_space<vmem>>, vector<128x128xbf16>
    %cst_6 = arith.constant dense<0.000000e+00> : vector<16x128xf32>
    %12 = tpu.matmul %10, %11, %cst_6 {dimension_numbers = #tpu.dot_dimension_numbers<[1], [0], [0], [1], [0, 0, 1, 1], [], []>} : vector<16x128xbf16>, vector<128x128xbf16>, vector<16x128xf32> -> vector<16x128xf32>
    %13 = vector.extract_strided_slice %1 {offsets = [1, 0], sizes = [1, 128], strides = [1, 1]} : vector<16x128xf32> to vector<1x128xf32>
    %14 = vector.broadcast %13 : vector<1x128xf32> to vector<16x128xf32>
    %15 = arith.addf %12, %14 : vector<16x128xf32>
    %cst_7 = arith.constant 0.000000e+00 : f32
    %16 = vector.broadcast %cst_7 : f32 to vector<16x128xf32>
    %17 = arith.maximumf %15, %16 : vector<16x128xf32>
    %18 = arith.truncf %17 : vector<16x128xf32> to vector<16x128xbf16>
    %c144 = arith.constant 144 : index
    %c0_8 = arith.constant 0 : index
    %19 = vector.load %arg2[%c144, %c0_8] : memref<416x128xbf16, #tpu.memory_space<vmem>>, vector<128x128xbf16>
    %cst_9 = arith.constant dense<0.000000e+00> : vector<16x128xf32>
    %20 = tpu.matmul %18, %19, %cst_9 {dimension_numbers = #tpu.dot_dimension_numbers<[1], [0], [0], [1], [0, 0, 1, 1], [], []>} : vector<16x128xbf16>, vector<128x128xbf16>, vector<16x128xf32> -> vector<16x128xf32>
    %21 = vector.extract_strided_slice %1 {offsets = [2, 0], sizes = [1, 128], strides = [1, 1]} : vector<16x128xf32> to vector<1x128xf32>
    %22 = vector.broadcast %21 : vector<1x128xf32> to vector<16x128xf32>
    %23 = arith.addf %20, %22 : vector<16x128xf32>
    %cst_10 = arith.constant 0.000000e+00 : f32
    %24 = vector.broadcast %cst_10 : f32 to vector<16x128xf32>
    %25 = arith.maximumf %23, %24 : vector<16x128xf32>
    %26 = arith.truncf %25 : vector<16x128xf32> to vector<16x128xbf16>
    %c272 = arith.constant 272 : index
    %c0_11 = arith.constant 0 : index
    %27 = vector.load %arg2[%c272, %c0_11] : memref<416x128xbf16, #tpu.memory_space<vmem>>, vector<128x128xbf16>
    %cst_12 = arith.constant dense<0.000000e+00> : vector<16x128xf32>
    %28 = tpu.matmul %26, %27, %cst_12 {dimension_numbers = #tpu.dot_dimension_numbers<[1], [0], [0], [1], [0, 0, 1, 1], [], []>} : vector<16x128xbf16>, vector<128x128xbf16>, vector<16x128xf32> -> vector<16x128xf32>
    %29 = vector.extract_strided_slice %1 {offsets = [3, 0], sizes = [1, 128], strides = [1, 1]} : vector<16x128xf32> to vector<1x128xf32>
    %30 = vector.broadcast %29 : vector<1x128xf32> to vector<16x128xf32>
    %31 = arith.addf %28, %30 : vector<16x128xf32>
    %32 = arith.negf %31 : vector<16x128xf32>
    %33 = math.exp %32 : vector<16x128xf32>
    %cst_13 = arith.constant 1.000000e+00 : f32
    %34 = vector.broadcast %cst_13 : f32 to vector<16x128xf32>
    %35 = arith.addf %34, %33 : vector<16x128xf32>
    %36 = arith.divf %34, %35 : vector<16x128xf32>
    %37 = arith.truncf %36 : vector<16x128xf32> to vector<16x128xbf16>
    %c0_14 = arith.constant 0 : index
    %c0_15 = arith.constant 0 : index
    %38 = vector.load %arg3[%c0_14, %c0_15] : memref<16x128xbf16, #tpu.memory_space<vmem>>, vector<16x128xbf16>
    tpu.vector_store %arg3[%c0_14, %c0_15], %37 {strides = array<i32>} : memref<16x128xbf16, #tpu.memory_space<vmem>>, vector<16x128xbf16>,
    return
  }
  func.func @transform_0(%arg0: i32) -> (i32, i32) {
    %c0_i32 = arith.constant 0 : i32
    %c0_i32_0 = arith.constant 0 : i32
    return %arg0, %c0_i32 : i32, i32
  }
  func.func @transform_1(%arg0: i32) -> (i32, i32) {
    %c0_i32 = arith.constant 0 : i32
    %c0_i32_0 = arith.constant 0 : i32
    %c0_i32_1 = arith.constant 0 : i32
    return %c0_i32, %c0_i32_0 : i32, i32
  }
  func.func @transform_2(%arg0: i32) -> (i32, i32) {
    %c0_i32 = arith.constant 0 : i32
    %c0_i32_0 = arith.constant 0 : i32
    return %arg0, %c0_i32 : i32, i32
  }
}

</mosaic_0001>

<llo_original>
// kernel: tpu_custom_call.1
$region0: #{tpu_custom_call.1}
  #allocation0 [shape = 'u32[]', space=smem, size = 0x4, offset = 0x4, fixed_abs, tag = 'smem constant byte address 0x4 - core index']
  #allocation1 [shape = 'u32[144,128]{1,0:T(1,128)}', space=vmem, size = 0x12000, scoped, tag = 'internal scratch']
  %s0 = inlined_call_operand.hbm [shape: bf16[16,16], index: 0, kind: input, shape index: {}]
  %s1 = inlined_call_operand.hbm [shape: bf16[416,128], index: 1, kind: input, shape index: {}]
  %s2 = inlined_call_operand.hbm [shape: bf16[16,128], index: 2, kind: output, shape index: {}]
  %s3 = sld [smem:[#allocation0]]
  $region26: #{tpu_custom_call.1} parent=0
    _
  %s5 = ssub.s32 1, %s3
  %s6 = scalar_select 0, %s5, %s3
  $region1: #{tpu_custom_call.1} parent=0
    #allocation2 [shape = 'u8[4096]{0}', space=vmem, size = 0x1000, scoped, tag = 'input window, operand 0, single buffered']
    #allocation3 [shape = 's32[1]{0}', space=sflag, size = 0x4, scoped, tag = 'scoped memory for tpu_custom_call.1']
    #allocation4 [shape = 's32[1]{0}', space=sflag, size = 0x4, scoped, tag = 'scoped memory for tpu_custom_call.1']
    #allocation5 [shape = 'u8[106496]{0}', space=vmem, size = 0x1a000, scoped, tag = 'input window, operand 1, single buffered']
    #allocation6 [shape = 's32[1]{0}', space=sflag, size = 0x4, scoped, tag = 'scoped memory for tpu_custom_call.1']
    #allocation7 [shape = 'u8[4096]{0}', space=vmem, size = 0x1000, scoped, tag = 'output window, operand 0, single buffered']
    %7 = vsyncpa [#allocation3], 0
    %8 = vsyncpa [#allocation6], 0
    %9 = vsyncpa [#allocation4], 0
    // Predicated region
    $region2: #{tpu_custom_call.1} parent=1 // pred_check
      _
    $region3: #{tpu_custom_call.1} parent=1 // pred_check_branch
      %11 = sbr.rel (0) target = $region5
    $region4: #{tpu_custom_call.1} parent=1 // pred_region
      %s13 = ssub.s32 128, 128
      %14 = vsyncadd [#allocation3], %s13
      %s15 = sshll.u32 [#allocation2], 4
      %s16 = int_to_ptr.vmem [resolvable:$true] %s15
      %21 = dma.hbm_to_vmem [thread:$0]  %s0, 128, %s16, [#allocation3], 64, 64, 4
    $region5: #{tpu_custom_call.1} parent=1 // pred_fallthru
      _
    // Predicated region
    $region6: #{tpu_custom_call.1} parent=1 // pred_check
      _
    $region7: #{tpu_custom_call.1} parent=1 // pred_check_branch
      %23 = sbr.rel (0) target = $region9
    $region8: #{tpu_custom_call.1} parent=1 // pred_region
      %s25 = ssub.s32 3328, 3328
      %26 = vsyncadd [#allocation6], %s25
      %s27 = sshll.u32 [#allocation5], 4
      %s28 = int_to_ptr.vmem [resolvable:$true] %s27
      %33 = dma.hbm_to_vmem [thread:$0]  %s1, 3328, %s28, [#allocation6], 64, 64, 4
    $region9: #{tpu_custom_call.1} parent=1 // pred_fallthru
      _
    // Predicated region
    $region10: #{tpu_custom_call.1} parent=1 // pred_check
      _
    $region11: #{tpu_custom_call.1} parent=1 // pred_check_branch
      %35 = sbr.rel (0) target = $region13
    $region12: #{tpu_custom_call.1} parent=1 // pred_region
      %36 = dma.done [#allocation3], 128
    $region13: #{tpu_custom_call.1} parent=1 // pred_fallthru
      _
    // Predicated region
    $region14: #{tpu_custom_call.1} parent=1 // pred_check
      _
    $region15: #{tpu_custom_call.1} parent=1 // pred_check_branch
      %38 = sbr.rel (0) target = $region17
    $region16: #{tpu_custom_call.1} parent=1 // pred_region
      %39 = dma.done [#allocation6], 3328
    $region17: #{tpu_custom_call.1} parent=1 // pred_fallthru
      _
    %v41 = vld [vmem:[#allocation5 + $0xc8] sm:$0xf]
    %v42 = vunpack.c.l.bf16 %v41
    %v43 = vld [vmem:[#allocation2] sm:$0xf]
    %v44 = vld [vmem:[#allocation2 + $0x4] sm:$0xf]
    %v45 = vld [vmem:[#allocation5] sm:$0xf]
    %v46 = vld [vmem:[#allocation5 + $0x4] sm:$0xf]
    %v47 = vlaneseq
    %v48 = vshrl.u32 %v47, 7
    %v49 = vsub.s32 0, %v48
    %v50 = vrot.slane %v42, %v49
    %v53 = vunpack.c.l.b16 %v43
    %v54 = vunpack.c.l.b16 %v44
    %v55 = vpack.c.b16 %v54, %v53
    %v58 = vunpack.c.l.b16 %v45
    %v59 = vunpack.c.l.b16 %v46
    %v60 = vpack.c.b16 %v59, %v58
    %vm62 = vcmask 130048
    %v64 = vsel %vm62, %v55, 0
    %66 = vmatprep.subr.bf16.mxu0 0
    %67 = vmatpush1.bf16.msra.mxu0 0
    %68 = vmatprep.subr.bf16.mxu0 0
    %69 = vmatpush1.bf16.msra.mxu0 0
    %70 = vmatprep.subr.bf16.mxu0 0
    %71 = vmatpush1.bf16.msra.mxu0 0
    %72 = vmatprep.subr.bf16.mxu0 0
    %73 = vmatpush1.bf16.msra.mxu0 0
    %74 = vmatprep.subr.bf16.mxu0 0
    %75 = vmatpush1.bf16.msra.mxu0 0
    %76 = vmatprep.subr.bf16.mxu0 0
    %77 = vmatpush1.bf16.msra.mxu0 0
    %78 = vmatprep.subr.bf16.mxu0 0
    %79 = vmatpush1.bf16.msra.mxu0 0
    %80 = vmatprep.subr.bf16.mxu0 0
    %81 = vmatpush1.bf16.msra.mxu0 %v60
    %82 = vmatprep.subr.bf16.mxu0 0
    %83 = vmatpush2.bf16.msra.mxu0 0
    %84 = vmatprep.subr.bf16.mxu0 0
    %85 = vmatpush2.bf16.msra.mxu0 0
    %86 = vmatprep.subr.bf16.mxu0 0
    %87 = vmatpush2.bf16.msra.mxu0 0
    %88 = vmatprep.subr.bf16.mxu0 0
    %89 = vmatpush2.bf16.msra.mxu0 0
    %90 = vmatprep.subr.bf16.mxu0 0
    %91 = vmatpush2.bf16.msra.mxu0 0
    %92 = vmatprep.subr.bf16.mxu0 0
    %93 = vmatpush2.bf16.msra.mxu0 0
    %94 = vmatprep.subr.bf16.mxu0 0
    %95 = vmatpush2.bf16.msra.mxu0 0
    %96 = vmatprep.subr.bf16.mxu0 0
    %97 = vmatpush2.bf16.msra.mxu0 0
    %98 = vmatprep.mubr.bf16.mxu0 0
    %99 = vmatmul.mubr.bf16.gmra.mxu0 %v64
    %v100 = vpop.f32.mrf.mxu0
    %v101 = vadd.f32 %v50, %v100
    %v102 = vpop.f32.mrf.mxu0
    %v103 = vpop.f32.mrf.mxu0
    %v104 = vadd.f32 %v50, %v103
    %v105 = vpop.f32.mrf.mxu0
    %106 = vdwg.mxu0
    %v107 = vmax.f32 %v101, 0.0
    %v108 = vmax.f32 %v104, 0.0
    %v109 = vpack.c.bf16 %v108, %v107
    %v110 = vld [vmem:[#allocation5 + $0x8] sm:$0xf]
    %v111 = vld [vmem:[#allocation5 + $0xc] sm:$0xf]
    %v112 = vld [vmem:[#allocation5 + $0x10] sm:$0xf]
    %v113 = vld [vmem:[#allocation5 + $0x14] sm:$0xf]
    %v114 = vld [vmem:[#allocation5 + $0x18] sm:$0xf]
    %v115 = vld [vmem:[#allocation5 + $0x1c] sm:$0xf]
    %v116 = vld [vmem:[#allocation5 + $0x20] sm:$0xf]
    %v117 = vld [vmem:[#allocation5 + $0x24] sm:$0xf]
    %v118 = vld [vmem:[#allocation5 + $0x28] sm:$0xf]
    %v119 = vld [vmem:[#allocation5 + $0x2c] sm:$0xf]
    %v120 = vld [vmem:[#allocation5 + $0x30] sm:$0xf]
    %v121 = vld [vmem:[#allocation5 + $0x34] sm:$0xf]
    %v122 = vld [vmem:[#allocation5 + $0x38] sm:$0xf]
    %v123 = vld [vmem:[#allocation5 + $0x3c] sm:$0xf]
    %v124 = vld [vmem:[#allocation5 + $0x40] sm:$0xf]
    %v125 = vld [vmem:[#allocation5 + $0x44] sm:$0xf]
    %v126 = vlaneseq
    %v127 = vshrl.u32 %v126, 7
    %v128 = vsub.s32 1, %v127
    %v129 = vrot.slane %v42, %v128
    %v146 = vunpack.c.l.b16 %v110
    %v147 = vunpack.c.l.b16 %v111
    %v148 = vunpack.c.l.b16 %v112
    %v149 = vunpack.c.l.b16 %v113
    %v150 = vunpack.c.l.b16 %v114
    %v151 = vunpack.c.l.b16 %v115
    %v152 = vunpack.c.l.b16 %v116
    %v153 = vunpack.c.l.b16 %v117
    %v154 = vunpack.c.l.b16 %v118
    %v155 = vunpack.c.l.b16 %v119
    %v156 = vunpack.c.l.b16 %v120
    %v157 = vunpack.c.l.b16 %v121
    %v158 = vunpack.c.l.b16 %v122
    %v159 = vunpack.c.l.b16 %v123
    %v160 = vunpack.c.l.b16 %v124
    %v161 = vunpack.c.l.b16 %v125
    %v162 = vpack.c.b16 %v147, %v146
    %v163 = vpack.c.b16 %v149, %v148
    %v164 = vpack.c.b16 %v151, %v150
    %v165 = vpack.c.b16 %v153, %v152
    %v166 = vpack.c.b16 %v155, %v154
    %v167 = vpack.c.b16 %v157, %v156
    %v168 = vpack.c.b16 %v159, %v158
    %v169 = vpack.c.b16 %v161, %v160
    %178 = vmatprep.subr.bf16.mxu0 0
    %179 = vmatpush1.bf16.msra.mxu0 %v169
    %180 = vmatprep.subr.bf16.mxu0 0
    %181 = vmatpush1.bf16.msra.mxu0 %v168
    %182 = vmatprep.subr.bf16.mxu0 0
    %183 = vmatpush1.bf16.msra.mxu0 %v167
    %184 = vmatprep.subr.bf16.mxu0 0
    %185 = vmatpush1.bf16.msra.mxu0 %v166
    %186 = vmatprep.subr.bf16.mxu0 0
    %187 = vmatpush1.bf16.msra.mxu0 %v165
    %188 = vmatprep.subr.bf16.mxu0 0
    %189 = vmatpush1.bf16.msra.mxu0 %v164
    %190 = vmatprep.subr.bf16.mxu0 0
    %191 = vmatpush1.bf16.msra.mxu0 %v163
    %192 = vmatprep.subr.bf16.mxu0 0
    %193 = vmatpush1.bf16.msra.mxu0 %v162
    %194 = vmatprep.subr.bf16.mxu0 0
    %195 = vmatpush2.bf16.msra.mxu0 0
    %196 = vmatprep.subr.bf16.mxu0 0
    %197 = vmatpush2.bf16.msra.mxu0 0
    %198 = vmatprep.subr.bf16.mxu0 0
    %199 = vmatpush2.bf16.msra.mxu0 0
    %200 = vmatprep.subr.bf16.mxu0 0
    %201 = vmatpush2.bf16.msra.mxu0 0
    %202 = vmatprep.subr.bf16.mxu0 0
    %203 = vmatpush2.bf16.msra.mxu0 0
    %204 = vmatprep.subr.bf16.mxu0 0
    %205 = vmatpush2.bf16.msra.mxu0 0
    %206 = vmatprep.subr.bf16.mxu0 0
    %207 = vmatpush2.bf16.msra.mxu0 0
    %208 = vmatprep.subr.bf16.mxu0 0
    %209 = vmatpush2.bf16.msra.mxu0 0
    %210 = vmatprep.mubr.bf16.mxu0 0
    %211 = vmatmul.mubr.bf16.gmra.mxu0 %v109
    %v212 = vpop.f32.mrf.mxu0
    %v213 = vadd.f32 %v129, %v212
    %v214 = vpop.f32.mrf.mxu0
    %v215 = vpop.f32.mrf.mxu0
    %v216 = vadd.f32 %v129, %v215
    %v217 = vpop.f32.mrf.mxu0
    %218 = vdwg.mxu0
    %v219 = vmax.f32 %v213, 0.0
    %v220 = vmax.f32 %v216, 0.0
    %v221 = vpack.c.bf16 %v220, %v219
    %v222 = vld [vmem:[#allocation5 + $0x48] sm:$0xf]
    %v223 = vld [vmem:[#allocation5 + $0x4c] sm:$0xf]
    %v224 = vld [vmem:[#allocation5 + $0x50] sm:$0xf]
    %v225 = vld [vmem:[#allocation5 + $0x54] sm:$0xf]
    %v226 = vld [vmem:[#allocation5 + $0x58] sm:$0xf]
    %v227 = vld [vmem:[#allocation5 + $0x5c] sm:$0xf]
    %v228 = vld [vmem:[#allocation5 + $0x60] sm:$0xf]
    %v229 = vld [vmem:[#allocation5 + $0x64] sm:$0xf]
    %v230 = vld [vmem:[#allocation5 + $0x68] sm:$0xf]
    %v231 = vld [vmem:[#allocation5 + $0x6c] sm:$0xf]
    %v232 = vld [vmem:[#allocation5 + $0x70] sm:$0xf]
    %v233 = vld [vmem:[#allocation5 + $0x74] sm:$0xf]
    %v234 = vld [vmem:[#allocation5 + $0x78] sm:$0xf]
    %v235 = vld [vmem:[#allocation5 + $0x7c] sm:$0xf]
    %v236 = vld [vmem:[#allocation5 + $0x80] sm:$0xf]
    %v237 = vld [vmem:[#allocation5 + $0x84] sm:$0xf]
    %v238 = vlaneseq
    %v239 = vshrl.u32 %v238, 7
    %v240 = vsub.s32 2, %v239
    %v241 = vrot.slane %v42, %v240
    %v258 = vunpack.c.l.b16 %v222
    %v259 = vunpack.c.l.b16 %v223
    %v260 = vunpack.c.l.b16 %v224
    %v261 = vunpack.c.l.b16 %v225
    %v262 = vunpack.c.l.b16 %v226
    %v263 = vunpack.c.l.b16 %v227
    %v264 = vunpack.c.l.b16 %v228
    %v265 = vunpack.c.l.b16 %v229
    %v266 = vunpack.c.l.b16 %v230
    %v267 = vunpack.c.l.b16 %v231
    %v268 = vunpack.c.l.b16 %v232
    %v269 = vunpack.c.l.b16 %v233
    %v270 = vunpack.c.l.b16 %v234
    %v271 = vunpack.c.l.b16 %v235
    %v272 = vunpack.c.l.b16 %v236
    %v273 = vunpack.c.l.b16 %v237
    %v274 = vpack.c.b16 %v259, %v258
    %v275 = vpack.c.b16 %v261, %v260
    %v276 = vpack.c.b16 %v263, %v262
    %v277 = vpack.c.b16 %v265, %v264
    %v278 = vpack.c.b16 %v267, %v266
    %v279 = vpack.c.b16 %v269, %v268
    %v280 = vpack.c.b16 %v271, %v270
    %v281 = vpack.c.b16 %v273, %v272
    %290 = vmatprep.subr.bf16.mxu0 0
    %291 = vmatpush1.bf16.msra.mxu0 %v281
    %292 = vmatprep.subr.bf16.mxu0 0
    %293 = vmatpush1.bf16.msra.mxu0 %v280
    %294 = vmatprep.subr.bf16.mxu0 0
    %295 = vmatpush1.bf16.msra.mxu0 %v279
    %296 = vmatprep.subr.bf16.mxu0 0
    %297 = vmatpush1.bf16.msra.mxu0 %v278
    %298 = vmatprep.subr.bf16.mxu0 0
    %299 = vmatpush1.bf16.msra.mxu0 %v277
    %300 = vmatprep.subr.bf16.mxu0 0
    %301 = vmatpush1.bf16.msra.mxu0 %v276
    %302 = vmatprep.subr.bf16.mxu0 0
    %303 = vmatpush1.bf16.msra.mxu0 %v275
    %304 = vmatprep.subr.bf16.mxu0 0
    %305 = vmatpush1.bf16.msra.mxu0 %v274
    %306 = vmatprep.subr.bf16.mxu0 0
    %307 = vmatpush2.bf16.msra.mxu0 0
    %308 = vmatprep.subr.bf16.mxu0 0
    %309 = vmatpush2.bf16.msra.mxu0 0
    %310 = vmatprep.subr.bf16.mxu0 0
    %311 = vmatpush2.bf16.msra.mxu0 0
    %312 = vmatprep.subr.bf16.mxu0 0
    %313 = vmatpush2.bf16.msra.mxu0 0
    %314 = vmatprep.subr.bf16.mxu0 0
    %315 = vmatpush2.bf16.msra.mxu0 0
    %316 = vmatprep.subr.bf16.mxu0 0
    %317 = vmatpush2.bf16.msra.mxu0 0
    %318 = vmatprep.subr.bf16.mxu0 0
    %319 = vmatpush2.bf16.msra.mxu0 0
    %320 = vmatprep.subr.bf16.mxu0 0
    %321 = vmatpush2.bf16.msra.mxu0 0
    %322 = vmatprep.mubr.bf16.mxu0 0
    %323 = vmatmul.mubr.bf16.gmra.mxu0 %v221
    %v324 = vpop.f32.mrf.mxu0
    %v325 = vadd.f32 %v241, %v324
    %v326 = vpop.f32.mrf.mxu0
    %v327 = vpop.f32.mrf.mxu0
    %v328 = vadd.f32 %v241, %v327
    %v329 = vpop.f32.mrf.mxu0
    %330 = vdwg.mxu0
    %v331 = vmax.f32 %v325, 0.0
    %v332 = vmax.f32 %v328, 0.0
    %v333 = vpack.c.bf16 %v332, %v331
    %v334 = vld [vmem:[#allocation5 + $0x88] sm:$0xf]
    %v335 = vld [vmem:[#allocation5 + $0x8c] sm:$0xf]
    %v336 = vld [vmem:[#allocation5 + $0x90] sm:$0xf]
    %v337 = vld [vmem:[#allocation5 + $0x94] sm:$0xf]
    %v338 = vld [vmem:[#allocation5 + $0x98] sm:$0xf]
    %v339 = vld [vmem:[#allocation5 + $0x9c] sm:$0xf]
    %v340 = vld [vmem:[#allocation5 + $0xa0] sm:$0xf]
    %v341 = vld [vmem:[#allocation5 + $0xa4] sm:$0xf]
    %v342 = vld [vmem:[#allocation5 + $0xa8] sm:$0xf]
    %v343 = vld [vmem:[#allocation5 + $0xac] sm:$0xf]
    %v344 = vld [vmem:[#allocation5 + $0xb0] sm:$0xf]
    %v345 = vld [vmem:[#allocation5 + $0xb4] sm:$0xf]
    %v346 = vld [vmem:[#allocation5 + $0xb8] sm:$0xf]
    %v347 = vld [vmem:[#allocation5 + $0xbc] sm:$0xf]
    %v348 = vld [vmem:[#allocation5 + $0xc0] sm:$0xf]
    %v349 = vld [vmem:[#allocation5 + $0xc4] sm:$0xf]
    %v350 = vlaneseq
    %v351 = vshrl.u32 %v350, 7
    %v352 = vsub.s32 3, %v351
    %v353 = vrot.slane %v42, %v352
    %v370 = vunpack.c.l.b16 %v334
    %v371 = vunpack.c.l.b16 %v335
    %v372 = vunpack.c.l.b16 %v336
    %v373 = vunpack.c.l.b16 %v337
    %v374 = vunpack.c.l.b16 %v338
    %v375 = vunpack.c.l.b16 %v339
    %v376 = vunpack.c.l.b16 %v340
    %v377 = vunpack.c.l.b16 %v341
    %v378 = vunpack.c.l.b16 %v342
    %v379 = vunpack.c.l.b16 %v343
    %v380 = vunpack.c.l.b16 %v344
    %v381 = vunpack.c.l.b16 %v345
    %v382 = vunpack.c.l.b16 %v346
    %v383 = vunpack.c.l.b16 %v347
    %v384 = vunpack.c.l.b16 %v348
    %v385 = vunpack.c.l.b16 %v349
    %v386 = vpack.c.b16 %v371, %v370
    %v387 = vpack.c.b16 %v373, %v372
    %v388 = vpack.c.b16 %v375, %v374
    %v389 = vpack.c.b16 %v377, %v376
    %v390 = vpack.c.b16 %v379, %v378
    %v391 = vpack.c.b16 %v381, %v380
    %v392 = vpack.c.b16 %v383, %v382
    %v393 = vpack.c.b16 %v385, %v384
    %402 = vmatprep.subr.bf16.mxu0 0
    %403 = vmatpush1.bf16.msra.mxu0 %v393
    %404 = vmatprep.subr.bf16.mxu0 0
    %405 = vmatpush1.bf16.msra.mxu0 %v392
    %406 = vmatprep.subr.bf16.mxu0 0
    %407 = vmatpush1.bf16.msra.mxu0 %v391
    %408 = vmatprep.subr.bf16.mxu0 0
    %409 = vmatpush1.bf16.msra.mxu0 %v390
    %410 = vmatprep.subr.bf16.mxu0 0
    %411 = vmatpush1.bf16.msra.mxu0 %v389
    %412 = vmatprep.subr.bf16.mxu0 0
    %413 = vmatpush1.bf16.msra.mxu0 %v388
    %414 = vmatprep.subr.bf16.mxu0 0
    %415 = vmatpush1.bf16.msra.mxu0 %v387
    %416 = vmatprep.subr.bf16.mxu0 0
    %417 = vmatpush1.bf16.msra.mxu0 %v386
    %418 = vmatprep.subr.bf16.mxu0 0
    %419 = vmatpush2.bf16.msra.mxu0 0
    %420 = vmatprep.subr.bf16.mxu0 0
    %421 = vmatpush2.bf16.msra.mxu0 0
    %422 = vmatprep.subr.bf16.mxu0 0
    %423 = vmatpush2.bf16.msra.mxu0 0
    %424 = vmatprep.subr.bf16.mxu0 0
    %425 = vmatpush2.bf16.msra.mxu0 0
    %426 = vmatprep.subr.bf16.mxu0 0
    %427 = vmatpush2.bf16.msra.mxu0 0
    %428 = vmatprep.subr.bf16.mxu0 0
    %429 = vmatpush2.bf16.msra.mxu0 0
    %430 = vmatprep.subr.bf16.mxu0 0
    %431 = vmatpush2.bf16.msra.mxu0 0
    %432 = vmatprep.subr.bf16.mxu0 0
    %433 = vmatpush2.bf16.msra.mxu0 0
    %434 = vmatprep.mubr.bf16.mxu0 0
    %435 = vmatmul.mubr.bf16.gmra.mxu0 %v333
    %v436 = vpop.f32.mrf.mxu0
    %v437 = vadd.f32 %v353, %v436
    %v438 = vpop.f32.mrf.mxu0
    %v439 = vpop.f32.mrf.mxu0
    %v440 = vadd.f32 %v353, %v439
    %v441 = vpop.f32.mrf.mxu0
    %442 = vdwg.mxu0
    %v443 = vxor.u32 %v437, 2147483648
    %v444 = vxor.u32 %v440, 2147483648
    %v445 = vmul.f32 %v443, 1.442695
    %v446 = vpow.pop %v445
    %v447 = vmul.f32 %v444, 1.442695
    %v448 = vpow.pop %v447
    %v449 = vadd.f32 %v446, 1.0
    %v450 = vadd.f32 %v448, 1.0
    %v451 = vrcp.pop %v449
    %v452 = vmul.f32 1.0, %v451
    %v453 = vrcp.pop %v450
    %v454 = vmul.f32 1.0, %v453
    %v455 = vpack.c.bf16 %v454, %v452
    %v457 = vunpack.c.l.b16 %v455
    %v458 = vunpack.c.h.b16 %v455
    %v459 = vpack.c.b16 %v457, %v457
    %v460 = vpack.c.b16 %v458, %v458
    %463 = vst [vmem:[#allocation7] sm:$0xf] %v459
    %464 = vst [vmem:[#allocation7 + $0x4] sm:$0xf] %v460
    // Predicated region
    $region18: #{tpu_custom_call.1} parent=1 // pred_check
      _
    $region19: #{tpu_custom_call.1} parent=1 // pred_check_branch
      %466 = sbr.rel (0) target = $region21
    $region20: #{tpu_custom_call.1} parent=1 // pred_region
      %s468 = ssub.s32 128, 128
      %469 = vsyncadd [#allocation4], %s468
      %s470 = sshll.u32 [#allocation7], 4
      %s471 = int_to_ptr.vmem [resolvable:$true] %s470
      %476 = dma.vmem_to_hbm [thread:$0]  %s471, 128, %s2, [#allocation4], 64, 64, 4
    $region21: #{tpu_custom_call.1} parent=1 // pred_fallthru
      _
    // Predicated region
    $region22: #{tpu_custom_call.1} parent=1 // pred_check
      _
    $region23: #{tpu_custom_call.1} parent=1 // pred_check_branch
      %478 = sbr.rel (0) target = $region25
    $region24: #{tpu_custom_call.1} parent=1 // pred_region
      %479 = dma.done [#allocation4], 128
    $region25: #{tpu_custom_call.1} parent=1 // pred_fallthru
      _
    %480 = vsyncpa [#allocation3], 1
    %481 = vsyncpa [#allocation6], 1
    %482 = vsyncpa [#allocation4], 1

// kernel: tpu_custom_call.1
$region0: #{tpu_custom_call.1}
  #allocation0 [shape = 'u32[]', space=smem, size = 0x4, offset = 0x4, fixed_abs, tag = 'smem constant byte address 0x4 - core index']
  #allocation1 [shape = 'u32[144,128]{1,0:T(1,128)}', space=vmem, size = 0x12000, scoped, tag = 'internal scratch']
  %s0 = inlined_call_operand.hbm [shape: bf16[16,16], index: 0, kind: input, shape index: {}]
  %s1 = inlined_call_operand.hbm [shape: bf16[416,128], index: 1, kind: input, shape index: {}]
  %s2 = inlined_call_operand.hbm [shape: bf16[16,128], index: 2, kind: output, shape index: {}]
  %s3 = sld [smem:[#allocation0]]
  $region26: #{tpu_custom_call.1} parent=0
    _
  %s5 = ssub.s32 1, %s3
  %s6 = scalar_select 0, %s5, %s3
  $region1: #{tpu_custom_call.1} parent=0
    #allocation2 [shape = 'u8[4096]{0}', space=vmem, size = 0x1000, scoped, tag = 'input window, operand 0, single buffered']
    #allocation3 [shape = 's32[1]{0}', space=sflag, size = 0x4, scoped, tag = 'scoped memory for tpu_custom_call.1']
    #allocation4 [shape = 's32[1]{0}', space=sflag, size = 0x4, scoped, tag = 'scoped memory for tpu_custom_call.1']
    #allocation5 [shape = 'u8[106496]{0}', space=vmem, size = 0x1a000, scoped, tag = 'input window, operand 1, single buffered']
    #allocation6 [shape = 's32[1]{0}', space=sflag, size = 0x4, scoped, tag = 'scoped memory for tpu_custom_call.1']
    #allocation7 [shape = 'u8[4096]{0}', space=vmem, size = 0x1000, scoped, tag = 'output window, operand 0, single buffered']
    %7 = vsyncpa [#allocation3], 0
    %8 = vsyncpa [#allocation6], 0
    %9 = vsyncpa [#allocation4], 0
    // Predicated region
    $region2: #{tpu_custom_call.1} parent=1 // pred_check
      _
    $region3: #{tpu_custom_call.1} parent=1 // pred_check_branch
      %11 = sbr.rel (0) target = $region5
    $region4: #{tpu_custom_call.1} parent=1 // pred_region
      %s13 = ssub.s32 128, 128
      %14 = vsyncadd [#allocation3], %s13
      %s15 = sshll.u32 [#allocation2], 4
      %s16 = int_to_ptr.vmem [resolvable:$true] %s15
      %21 = dma.hbm_to_vmem [thread:$0]  %s0, 128, %s16, [#allocation3], 64, 64, 4
    $region5: #{tpu_custom_call.1} parent=1 // pred_fallthru
      _
    // Predicated region
    $region6: #{tpu_custom_call.1} parent=1 // pred_check
      _
    $region7: #{tpu_custom_call.1} parent=1 // pred_check_branch
      %23 = sbr.rel (0) target = $region9
    $region8: #{tpu_custom_call.1} parent=1 // pred_region
      %s25 = ssub.s32 3328, 3328
      %26 = vsyncadd [#allocation6], %s25
      %s27 = sshll.u32 [#allocation5], 4
      %s28 = int_to_ptr.vmem [resolvable:$true] %s27
      %33 = dma.hbm_to_vmem [thread:$0]  %s1, 3328, %s28, [#allocation6], 64, 64, 4
    $region9: #{tpu_custom_call.1} parent=1 // pred_fallthru
      _
    // Predicated region
    $region10: #{tpu_custom_call.1} parent=1 // pred_check
      _
    $region11: #{tpu_custom_call.1} parent=1 // pred_check_branch
      %35 = sbr.rel (0) target = $region13
    $region12: #{tpu_custom_call.1} parent=1 // pred_region
      %36 = dma.done [#allocation3], 128
    $region13: #{tpu_custom_call.1} parent=1 // pred_fallthru
      _
    // Predicated region
    $region14: #{tpu_custom_call.1} parent=1 // pred_check
      _
    $region15: #{tpu_custom_call.1} parent=1 // pred_check_branch
      %38 = sbr.rel (0) target = $region17
    $region16: #{tpu_custom_call.1} parent=1 // pred_region
      %39 = dma.done [#allocation6], 3328
    $region17: #{tpu_custom_call.1} parent=1 // pred_fallthru
      _
    %v41 = vld [vmem:[#allocation5 + $0xc8] sm:$0xf]
    %v42 = vunpack.c.l.bf16 %v41
    %v43 = vld [vmem:[#allocation2] sm:$0xf]
    %v44 = vld [vmem:[#allocation2 + $0x4] sm:$0xf]
    %v45 = vld [vmem:[#allocation5] sm:$0xf]
    %v46 = vld [vmem:[#allocation5 + $0x4] sm:$0xf]
    %v47 = vlaneseq
    %v48 = vshrl.u32 %v47, 7
    %v49 = vsub.s32 0, %v48
    %v50 = vrot.slane %v42, %v49
    %v53 = vunpack.c.l.b16 %v43
    %v54 = vunpack.c.l.b16 %v44
    %v55 = vpack.c.b16 %v54, %v53
    %v58 = vunpack.c.l.b16 %v45
    %v59 = vunpack.c.l.b16 %v46
    %v60 = vpack.c.b16 %v59, %v58
    %vm62 = vcmask 130048
    %v64 = vsel %vm62, %v55, 0
    %66 = vmatprep.subr.bf16.mxu0 0
    %67 = vmatpush1.bf16.msra.mxu0 0
    %68 = vmatprep.subr.bf16.mxu0 0
    %69 = vmatpush1.bf16.msra.mxu0 0
    %70 = vmatprep.subr.bf16.mxu0 0
    %71 = vmatpush1.bf16.msra.mxu0 0
    %72 = vmatprep.subr.bf16.mxu0 0
    %73 = vmatpush1.bf16.msra.mxu0 0
    %74 = vmatprep.subr.bf16.mxu0 0
    %75 = vmatpush1.bf16.msra.mxu0 0
    %76 = vmatprep.subr.bf16.mxu0 0
    %77 = vmatpush1.bf16.msra.mxu0 0
    %78 = vmatprep.subr.bf16.mxu0 0
    %79 = vmatpush1.bf16.msra.mxu0 0
    %80 = vmatprep.subr.bf16.mxu0 0
    %81 = vmatpush1.bf16.msra.mxu0 %v60
    %82 = vmatprep.subr.bf16.mxu0 0
    %83 = vmatpush2.bf16.msra.mxu0 0
    %84 = vmatprep.subr.bf16.mxu0 0
    %85 = vmatpush2.bf16.msra.mxu0 0
    %86 = vmatprep.subr.bf16.mxu0 0
    %87 = vmatpush2.bf16.msra.mxu0 0
    %88 = vmatprep.subr.bf16.mxu0 0
    %89 = vmatpush2.bf16.msra.mxu0 0
    %90 = vmatprep.subr.bf16.mxu0 0
    %91 = vmatpush2.bf16.msra.mxu0 0
    %92 = vmatprep.subr.bf16.mxu0 0
    %93 = vmatpush2.bf16.msra.mxu0 0
    %94 = vmatprep.subr.bf16.mxu0 0
    %95 = vmatpush2.bf16.msra.mxu0 0
    %96 = vmatprep.subr.bf16.mxu0 0
    %97 = vmatpush2.bf16.msra.mxu0 0
    %98 = vmatprep.mubr.bf16.mxu0 0
    %99 = vmatmul.mubr.bf16.gmra.mxu0 %v64
    %v100 = vpop.f32.mrf.mxu0
    %v101 = vadd.f32 %v50, %v100
    %v102 = vpop.f32.mrf.mxu0
    %v103 = vpop.f32.mrf.mxu0
    %v104 = vadd.f32 %v50, %v103
    %v105 = vpop.f32.mrf.mxu0
    %106 = vdwg.mxu0
    %v107 = vmax.f32 %v101, 0.0
    %v108 = vmax.f32 %v104, 0.0
    %v109 = vpack.c.bf16 %v108, %v107
    %v110 = vld [vmem:[#allocation5 + $0x8] sm:$0xf]
    %v111 = vld [vmem:[#allocation5 + $0xc] sm:$0xf]
    %v112 = vld [vmem:[#allocation5 + $0x10] sm:$0xf]
    %v113 = vld [vmem:[#allocation5 + $0x14] sm:$0xf]
    %v114 = vld [vmem:[#allocation5 + $0x18] sm:$0xf]
    %v115 = vld [vmem:[#allocation5 + $0x1c] sm:$0xf]
    %v116 = vld [vmem:[#allocation5 + $0x20] sm:$0xf]
    %v117 = vld [vmem:[#allocation5 + $0x24] sm:$0xf]
    %v118 = vld [vmem:[#allocation5 + $0x28] sm:$0xf]
    %v119 = vld [vmem:[#allocation5 + $0x2c] sm:$0xf]
    %v120 = vld [vmem:[#allocation5 + $0x30] sm:$0xf]
    %v121 = vld [vmem:[#allocation5 + $0x34] sm:$0xf]
    %v122 = vld [vmem:[#allocation5 + $0x38] sm:$0xf]
    %v123 = vld [vmem:[#allocation5 + $0x3c] sm:$0xf]
    %v124 = vld [vmem:[#allocation5 + $0x40] sm:$0xf]
    %v125 = vld [vmem:[#allocation5 + $0x44] sm:$0xf]
    %v126 = vlaneseq
    %v127 = vshrl.u32 %v126, 7
    %v128 = vsub.s32 1, %v127
    %v129 = vrot.slane %v42, %v128
    %v146 = vunpack.c.l.b16 %v110
    %v147 = vunpack.c.l.b16 %v111
    %v148 = vunpack.c.l.b16 %v112
    %v149 = vunpack.c.l.b16 %v113
    %v150 = vunpack.c.l.b16 %v114
    %v151 = vunpack.c.l.b16 %v115
    %v152 = vunpack.c.l.b16 %v116
    %v153 = vunpack.c.l.b16 %v117
    %v154 = vunpack.c.l.b16 %v118
    %v155 = vunpack.c.l.b16 %v119
    %v156 = vunpack.c.l.b16 %v120
    %v157 = vunpack.c.l.b16 %v121
    %v158 = vunpack.c.l.b16 %v122
    %v159 = vunpack.c.l.b16 %v123
    %v160 = vunpack.c.l.b16 %v124
    %v161 = vunpack.c.l.b16 %v125
    %v162 = vpack.c.b16 %v147, %v146
    %v163 = vpack.c.b16 %v149, %v148
    %v164 = vpack.c.b16 %v151, %v150
    %v165 = vpack.c.b16 %v153, %v152
    %v166 = vpack.c.b16 %v155, %v154
    %v167 = vpack.c.b16 %v157, %v156
    %v168 = vpack.c.b16 %v159, %v158
    %v169 = vpack.c.b16 %v161, %v160
    %178 = vmatprep.subr.bf16.mxu0 0
    %179 = vmatpush1.bf16.msra.mxu0 %v169
    %180 = vmatprep.subr.bf16.mxu0 0
    %181 = vmatpush1.bf16.msra.mxu0 %v168
    %182 = vmatprep.subr.bf16.mxu0 0
    %183 = vmatpush1.bf16.msra.mxu0 %v167
    %184 = vmatprep.subr.bf16.mxu0 0
    %185 = vmatpush1.bf16.msra.mxu0 %v166
    %186 = vmatprep.subr.bf16.mxu0 0
    %187 = vmatpush1.bf16.msra.mxu0 %v165
    %188 = vmatprep.subr.bf16.mxu0 0
    %189 = vmatpush1.bf16.msra.mxu0 %v164
    %190 = vmatprep.subr.bf16.mxu0 0
    %191 = vmatpush1.bf16.msra.mxu0 %v163
    %192 = vmatprep.subr.bf16.mxu0 0
    %193 = vmatpush1.bf16.msra.mxu0 %v162
    %194 = vmatprep.subr.bf16.mxu0 0
    %195 = vmatpush2.bf16.msra.mxu0 0
    %196 = vmatprep.subr.bf16.mxu0 0
    %197 = vmatpush2.bf16.msra.mxu0 0
    %198 = vmatprep.subr.bf16.mxu0 0
    %199 = vmatpush2.bf16.msra.mxu0 0
    %200 = vmatprep.subr.bf16.mxu0 0
    %201 = vmatpush2.bf16.msra.mxu0 0
    %202 = vmatprep.subr.bf16.mxu0 0
    %203 = vmatpush2.bf16.msra.mxu0 0
    %204 = vmatprep.subr.bf16.mxu0 0
    %205 = vmatpush2.bf16.msra.mxu0 0
    %206 = vmatprep.subr.bf16.mxu0 0
    %207 = vmatpush2.bf16.msra.mxu0 0
    %208 = vmatprep.subr.bf16.mxu0 0
    %209 = vmatpush2.bf16.msra.mxu0 0
    %210 = vmatprep.mubr.bf16.mxu0 0
    %211 = vmatmul.mubr.bf16.gmra.mxu0 %v109
    %v212 = vpop.f32.mrf.mxu0
    %v213 = vadd.f32 %v129, %v212
    %v214 = vpop.f32.mrf.mxu0
    %v215 = vpop.f32.mrf.mxu0
    %v216 = vadd.f32 %v129, %v215
    %v217 = vpop.f32.mrf.mxu0
    %218 = vdwg.mxu0
    %v219 = vmax.f32 %v213, 0.0
    %v220 = vmax.f32 %v216, 0.0
    %v221 = vpack.c.bf16 %v220, %v219
    %v222 = vld [vmem:[#allocation5 + $0x48] sm:$0xf]
    %v223 = vld [vmem:[#allocation5 + $0x4c] sm:$0xf]
    %v224 = vld [vmem:[#allocation5 + $0x50] sm:$0xf]
    %v225 = vld [vmem:[#allocation5 + $0x54] sm:$0xf]
    %v226 = vld [vmem:[#allocation5 + $0x58] sm:$0xf]
    %v227 = vld [vmem:[#allocation5 + $0x5c] sm:$0xf]
    %v228 = vld [vmem:[#allocation5 + $0x60] sm:$0xf]
    %v229 = vld [vmem:[#allocation5 + $0x64] sm:$0xf]
    %v230 = vld [vmem:[#allocation5 + $0x68] sm:$0xf]
    %v231 = vld [vmem:[#allocation5 + $0x6c] sm:$0xf]
    %v232 = vld [vmem:[#allocation5 + $0x70] sm:$0xf]
    %v233 = vld [vmem:[#allocation5 + $0x74] sm:$0xf]
    %v234 = vld [vmem:[#allocation5 + $0x78] sm:$0xf]
    %v235 = vld [vmem:[#allocation5 + $0x7c] sm:$0xf]
    %v236 = vld [vmem:[#allocation5 + $0x80] sm:$0xf]
    %v237 = vld [vmem:[#allocation5 + $0x84] sm:$0xf]
    %v238 = vlaneseq
    %v239 = vshrl.u32 %v238, 7
    %v240 = vsub.s32 2, %v239
    %v241 = vrot.slane %v42, %v240
    %v258 = vunpack.c.l.b16 %v222
    %v259 = vunpack.c.l.b16 %v223
    %v260 = vunpack.c.l.b16 %v224
    %v261 = vunpack.c.l.b16 %v225
    %v262 = vunpack.c.l.b16 %v226
    %v263 = vunpack.c.l.b16 %v227
    %v264 = vunpack.c.l.b16 %v228
    %v265 = vunpack.c.l.b16 %v229
    %v266 = vunpack.c.l.b16 %v230
    %v267 = vunpack.c.l.b16 %v231
    %v268 = vunpack.c.l.b16 %v232
    %v269 = vunpack.c.l.b16 %v233
    %v270 = vunpack.c.l.b16 %v234
    %v271 = vunpack.c.l.b16 %v235
    %v272 = vunpack.c.l.b16 %v236
    %v273 = vunpack.c.l.b16 %v237
    %v274 = vpack.c.b16 %v259, %v258
    %v275 = vpack.c.b16 %v261, %v260
    %v276 = vpack.c.b16 %v263, %v262
    %v277 = vpack.c.b16 %v265, %v264
    %v278 = vpack.c.b16 %v267, %v266
    %v279 = vpack.c.b16 %v269, %v268
    %v280 = vpack.c.b16 %v271, %v270
    %v281 = vpack.c.b16 %v273, %v272
    %290 = vmatprep.subr.bf16.mxu0 0
    %291 = vmatpush1.bf16.msra.mxu0 %v281
    %292 = vmatprep.subr.bf16.mxu0 0
    %293 = vmatpush1.bf16.msra.mxu0 %v280
    %294 = vmatprep.subr.bf16.mxu0 0
    %295 = vmatpush1.bf16.msra.mxu0 %v279
    %296 = vmatprep.subr.bf16.mxu0 0
    %297 = vmatpush1.bf16.msra.mxu0 %v278
    %298 = vmatprep.subr.bf16.mxu0 0
    %299 = vmatpush1.bf16.msra.mxu0 %v277
    %300 = vmatprep.subr.bf16.mxu0 0
    %301 = vmatpush1.bf16.msra.mxu0 %v276
    %302 = vmatprep.subr.bf16.mxu0 0
    %303 = vmatpush1.bf16.msra.mxu0 %v275
    %304 = vmatprep.subr.bf16.mxu0 0
    %305 = vmatpush1.bf16.msra.mxu0 %v274
    %306 = vmatprep.subr.bf16.mxu0 0
    %307 = vmatpush2.bf16.msra.mxu0 0
    %308 = vmatprep.subr.bf16.mxu0 0
    %309 = vmatpush2.bf16.msra.mxu0 0
    %310 = vmatprep.subr.bf16.mxu0 0
    %311 = vmatpush2.bf16.msra.mxu0 0
    %312 = vmatprep.subr.bf16.mxu0 0
    %313 = vmatpush2.bf16.msra.mxu0 0
    %314 = vmatprep.subr.bf16.mxu0 0
    %315 = vmatpush2.bf16.msra.mxu0 0
    %316 = vmatprep.subr.bf16.mxu0 0
    %317 = vmatpush2.bf16.msra.mxu0 0
    %318 = vmatprep.subr.bf16.mxu0 0
    %319 = vmatpush2.bf16.msra.mxu0 0
    %320 = vmatprep.subr.bf16.mxu0 0
    %321 = vmatpush2.bf16.msra.mxu0 0
    %322 = vmatprep.mubr.bf16.mxu0 0
    %323 = vmatmul.mubr.bf16.gmra.mxu0 %v221
    %v324 = vpop.f32.mrf.mxu0
    %v325 = vadd.f32 %v241, %v324
    %v326 = vpop.f32.mrf.mxu0
    %v327 = vpop.f32.mrf.mxu0
    %v328 = vadd.f32 %v241, %v327
    %v329 = vpop.f32.mrf.mxu0
    %330 = vdwg.mxu0
    %v331 = vmax.f32 %v325, 0.0
    %v332 = vmax.f32 %v328, 0.0
    %v333 = vpack.c.bf16 %v332, %v331
    %v334 = vld [vmem:[#allocation5 + $0x88] sm:$0xf]
    %v335 = vld [vmem:[#allocation5 + $0x8c] sm:$0xf]
    %v336 = vld [vmem:[#allocation5 + $0x90] sm:$0xf]
    %v337 = vld [vmem:[#allocation5 + $0x94] sm:$0xf]
    %v338 = vld [vmem:[#allocation5 + $0x98] sm:$0xf]
    %v339 = vld [vmem:[#allocation5 + $0x9c] sm:$0xf]
    %v340 = vld [vmem:[#allocation5 + $0xa0] sm:$0xf]
    %v341 = vld [vmem:[#allocation5 + $0xa4] sm:$0xf]
    %v342 = vld [vmem:[#allocation5 + $0xa8] sm:$0xf]
    %v343 = vld [vmem:[#allocation5 + $0xac] sm:$0xf]
    %v344 = vld [vmem:[#allocation5 + $0xb0] sm:$0xf]
    %v345 = vld [vmem:[#allocation5 + $0xb4] sm:$0xf]
    %v346 = vld [vmem:[#allocation5 + $0xb8] sm:$0xf]
    %v347 = vld [vmem:[#allocation5 + $0xbc] sm:$0xf]
    %v348 = vld [vmem:[#allocation5 + $0xc0] sm:$0xf]
    %v349 = vld [vmem:[#allocation5 + $0xc4] sm:$0xf]
    %v350 = vlaneseq
    %v351 = vshrl.u32 %v350, 7
    %v352 = vsub.s32 3, %v351
    %v353 = vrot.slane %v42, %v352
    %v370 = vunpack.c.l.b16 %v334
    %v371 = vunpack.c.l.b16 %v335
    %v372 = vunpack.c.l.b16 %v336
    %v373 = vunpack.c.l.b16 %v337
    %v374 = vunpack.c.l.b16 %v338
    %v375 = vunpack.c.l.b16 %v339
    %v376 = vunpack.c.l.b16 %v340
    %v377 = vunpack.c.l.b16 %v341
    %v378 = vunpack.c.l.b16 %v342
    %v379 = vunpack.c.l.b16 %v343
    %v380 = vunpack.c.l.b16 %v344
    %v381 = vunpack.c.l.b16 %v345
    %v382 = vunpack.c.l.b16 %v346
    %v383 = vunpack.c.l.b16 %v347
    %v384 = vunpack.c.l.b16 %v348
    %v385 = vunpack.c.l.b16 %v349
    %v386 = vpack.c.b16 %v371, %v370
    %v387 = vpack.c.b16 %v373, %v372
    %v388 = vpack.c.b16 %v375, %v374
    %v389 = vpack.c.b16 %v377, %v376
    %v390 = vpack.c.b16 %v379, %v378
    %v391 = vpack.c.b16 %v381, %v380
    %v392 = vpack.c.b16 %v383, %v382
    %v393 = vpack.c.b16 %v385, %v384
    %402 = vmatprep.subr.bf16.mxu0 0
    %403 = vmatpush1.bf16.msra.mxu0 %v393
    %404 = vmatprep.subr.bf16.mxu0 0
    %405 = vmatpush1.bf16.msra.mxu0 %v392
    %406 = vmatprep.subr.bf16.mxu0 0
    %407 = vmatpush1.bf16.msra.mxu0 %v391
    %408 = vmatprep.subr.bf16.mxu0 0
    %409 = vmatpush1.bf16.msra.mxu0 %v390
    %410 = vmatprep.subr.bf16.mxu0 0
    %411 = vmatpush1.bf16.msra.mxu0 %v389
    %412 = vmatprep.subr.bf16.mxu0 0
    %413 = vmatpush1.bf16.msra.mxu0 %v388
    %414 = vmatprep.subr.bf16.mxu0 0
    %415 = vmatpush1.bf16.msra.mxu0 %v387
    %416 = vmatprep.subr.bf16.mxu0 0
    %417 = vmatpush1.bf16.msra.mxu0 %v386
    %418 = vmatprep.subr.bf16.mxu0 0
    %419 = vmatpush2.bf16.msra.mxu0 0
    %420 = vmatprep.subr.bf16.mxu0 0
    %421 = vmatpush2.bf16.msra.mxu0 0
    %422 = vmatprep.subr.bf16.mxu0 0
    %423 = vmatpush2.bf16.msra.mxu0 0
    %424 = vmatprep.subr.bf16.mxu0 0
    %425 = vmatpush2.bf16.msra.mxu0 0
    %426 = vmatprep.subr.bf16.mxu0 0
    %427 = vmatpush2.bf16.msra.mxu0 0
    %428 = vmatprep.subr.bf16.mxu0 0
    %429 = vmatpush2.bf16.msra.mxu0 0
    %430 = vmatprep.subr.bf16.mxu0 0
    %431 = vmatpush2.bf16.msra.mxu0 0
    %432 = vmatprep.subr.bf16.mxu0 0
    %433 = vmatpush2.bf16.msra.mxu0 0
    %434 = vmatprep.mubr.bf16.mxu0 0
    %435 = vmatmul.mubr.bf16.gmra.mxu0 %v333
    %v436 = vpop.f32.mrf.mxu0
    %v437 = vadd.f32 %v353, %v436
    %v438 = vpop.f32.mrf.mxu0
    %v439 = vpop.f32.mrf.mxu0
    %v440 = vadd.f32 %v353, %v439
    %v441 = vpop.f32.mrf.mxu0
    %442 = vdwg.mxu0
    %v443 = vxor.u32 %v437, 2147483648
    %v444 = vxor.u32 %v440, 2147483648
    %v445 = vmul.f32 %v443, 1.442695
    %v446 = vpow.pop %v445
    %v447 = vmul.f32 %v444, 1.442695
    %v448 = vpow.pop %v447
    %v449 = vadd.f32 %v446, 1.0
    %v450 = vadd.f32 %v448, 1.0
    %v451 = vrcp.pop %v449
    %v452 = vmul.f32 1.0, %v451
    %v453 = vrcp.pop %v450
    %v454 = vmul.f32 1.0, %v453
    %v455 = vpack.c.bf16 %v454, %v452
    %v457 = vunpack.c.l.b16 %v455
    %v458 = vunpack.c.h.b16 %v455
    %v459 = vpack.c.b16 %v457, %v457
    %v460 = vpack.c.b16 %v458, %v458
    %463 = vst [vmem:[#allocation7] sm:$0xf] %v459
    %464 = vst [vmem:[#allocation7 + $0x4] sm:$0xf] %v460
    // Predicated region
    $region18: #{tpu_custom_call.1} parent=1 // pred_check
      _
    $region19: #{tpu_custom_call.1} parent=1 // pred_check_branch
      %466 = sbr.rel (0) target = $region21
    $region20: #{tpu_custom_call.1} parent=1 // pred_region
      %s468 = ssub.s32 128, 128
      %469 = vsyncadd [#allocation4], %s468
      %s470 = sshll.u32 [#allocation7], 4
      %s471 = int_to_ptr.vmem [resolvable:$true] %s470
      %476 = dma.vmem_to_hbm [thread:$0]  %s471, 128, %s2, [#allocation4], 64, 64, 4
    $region21: #{tpu_custom_call.1} parent=1 // pred_fallthru
      _
    // Predicated region
    $region22: #{tpu_custom_call.1} parent=1 // pred_check
      _
    $region23: #{tpu_custom_call.1} parent=1 // pred_check_branch
      %478 = sbr.rel (0) target = $region25
    $region24: #{tpu_custom_call.1} parent=1 // pred_region
      %479 = dma.done [#allocation4], 128
    $region25: #{tpu_custom_call.1} parent=1 // pred_fallthru
      _
    %480 = vsyncpa [#allocation3], 1
    %481 = vsyncpa [#allocation6], 1
    %482 = vsyncpa [#allocation4], 1

</llo_original>
